<compile_context>
chip_gen: v6e
topology: v6e:2x2x1
jax: 0.10.0
libtpu: 0.0.40
codegen_flags: <defaults>
</compile_context>

<pallas_src>
import jax
import jax.numpy as jnp
from jax.experimental import pallas as pl
from jax.experimental.pallas import tpu as pltpu

_LANES = 128


def _cdiv(a, b):
    return (a + b - 1) // b


def _round_up(n, m):
    return ((n + m - 1) // m) * m


def _circle_affine_kernel(params_ref, x_ref, o_ref):
    # params_ref: SMEM f32[3] = [w_eff0, w_eff1, b_eff]
    # x_ref:      VMEM [2, tile_r, 128]  dense feature planes
    # o_ref:      VMEM [tile_r, 128]     dense output tile
    w0 = params_ref[0]
    w1 = params_ref[1]
    b = params_ref[2]
    x0 = x_ref[0].astype(jnp.float32)
    x1 = x_ref[1].astype(jnp.float32)
    o_ref[...] = (x0 * w0 + x1 * w1 + b).astype(o_ref.dtype)


def circle_model_v0(x, w1, b1, w2, b2, *, max_tile_r=512, dense_output=False):
    """x: [B, 2]; returns [B, 1] (torch parity) or [B] if dense_output=True.

    NOTE: for tiny B plain XLA is at least as fast (per-call overhead
    dominates); this kernel targets large-B, HBM-bandwidth-bound paths.
    """
    B = x.shape[0]

    # bf16 in/out halves HBM traffic on this purely memory-bound kernel;
    # compute is always f32 on the VPU (store-side cast is free).
    compute_dtype = jnp.bfloat16 if x.dtype == jnp.bfloat16 else jnp.float32
    x = x.astype(compute_dtype)

    # Collapse the two affine layers once, outside the kernel (~15 flops).
    w_eff = (w1 @ w2).reshape(2)                    # [2]
    b_eff = (b1 @ w2 + b2).reshape(1)               # [1]
    params = jnp.concatenate([w_eff, b_eff]).astype(jnp.float32)   # [3] -> SMEM

    # Dense row/lane layout: batch element n -> (row n // 128, lane n % 128).
    align = 16 if compute_dtype == jnp.bfloat16 else 8   # sublane packing
    R = _cdiv(B, _LANES)
    # Tile rows: aim for >=2 grid steps (pipeline overlap + both v7x TCs) while
    # keeping per-step buffers small enough for every generation's scoped VMEM.
    tile_r = max(align, min(max_tile_r, _round_up(_cdiv(R, 2), align)))
    R_pad = _round_up(max(R, 1), tile_r)
    N_pad = R_pad * _LANES

    # Deinterleave [B,2] -> dense feature planes [2, R_pad, 128].
    xp = x if N_pad == B else jnp.pad(x, ((0, N_pad - B), (0, 0)))
    planes = xp.T.reshape(2, R_pad, _LANES)

    grid = (R_pad // tile_r,)
    bytes_per = jnp.dtype(compute_dtype).itemsize

    out = pl.pallas_call(
        _circle_affine_kernel,
        out_shape=jax.ShapeDtypeStruct((R_pad, _LANES), compute_dtype),
        grid=grid,
        in_specs=[
            # Fused scalars in SMEM: no padded (8,128) VMEM tile for 3 floats.
            pl.BlockSpec(memory_space=pltpu.MemorySpace.SMEM),
            # Dense, lane-full input tile: contiguous DMA, full vregs.
            pl.BlockSpec((2, tile_r, _LANES), lambda i: (0, i, 0),
                         memory_space=pltpu.MemorySpace.VMEM),
        ],
        out_specs=pl.BlockSpec((tile_r, _LANES), lambda i: (i, 0),
                               memory_space=pltpu.MemorySpace.VMEM),
        compiler_params=pltpu.CompilerParams(
            dimension_semantics=("parallel",),
        ),
        cost_estimate=pl.CostEstimate(
            flops=4 * N_pad, transcendentals=0,
            bytes_accessed=3 * bytes_per * N_pad),
    )(params, planes)

    y = out.reshape(N_pad)[:B]
    if dense_output:
        return y              # lane-dense result, preferred for TPU consumers
    return y.reshape(B, 1)    # torch-shape parity at the API boundary


def init_params(key):
    """nn.Linear-shaped params, stored pre-transposed:
       layer_1: weight (5,2), bias (5,) -> w1 (2,5), b1 (1,5)
       layer_2: weight (1,5), bias (1,) -> w2 (5,1), b2 (1,1)"""
    k1, k2, k3, k4 = jax.random.split(key, 4)
    bound1 = 1.0 / jnp.sqrt(2.0)
    bound2 = 1.0 / jnp.sqrt(5.0)
    w1 = jax.random.uniform(k1, (2, 5), jnp.float32, -bound1, bound1)
    b1 = jax.random.uniform(k2, (1, 5), jnp.float32, -bound1, bound1)
    w2 = jax.random.uniform(k3, (5, 1), jnp.float32, -bound2, bound2)
    b2 = jax.random.uniform(k4, (1, 1), jnp.float32, -bound2, bound2)
    return w1, b1, w2, b2


if __name__ == "__main__":
    key = jax.random.PRNGKey(0)
    k_params, k_x = jax.random.split(key)
    w1, b1, w2, b2 = init_params(k_params)

    B = 8
    x = jax.random.normal(k_x, (B, 2), jnp.float32)

    out = jax.block_until_ready(circle_model_v0(x, w1, b1, w2, b2))

    # Reference: the un-fused two-matmul forward pass (torch semantics).
    ref = (x @ w1 + b1) @ w2 + b2
    assert out.shape == (B, 1)
    assert jnp.allclose(out, ref, atol=1e-5, rtol=1e-5), float(jnp.abs(out - ref).max())

    print("KERNEL_OK")
</pallas_src>

<mosaic_0001>
module attributes {stable_mosaic.version = 11 : i64} {
  func.func @_circle_affine_kernel(%arg0: i32, %arg1: memref<3xf32, #tpu.memory_space<smem>>, %arg2: memref<2x8x128xf32, #tpu.memory_space<vmem>>, %arg3: memref<8x128xf32, #tpu.memory_space<vmem>>) attributes {dimension_semantics = [#tpu.dimension_semantics<parallel>], iteration_bounds = array<i64: 1>, scalar_prefetch = 0 : i64, scratch_operands = 0 : i64, tpu.core_type = #tpu.core_type<tc>, window_params = [{transform_indices = @transform_0, window_bounds = array<i64: 3>}, {transform_indices = @transform_1, window_bounds = array<i64: 2, 8, 128>}, {transform_indices = @transform_2, window_bounds = array<i64: 8, 128>}]} {
    %c0 = arith.constant 0 : index
    %0 = memref.load %arg1[%c0] : memref<3xf32, #tpu.memory_space<smem>>
    %c1 = arith.constant 1 : index
    %1 = memref.load %arg1[%c1] : memref<3xf32, #tpu.memory_space<smem>>
    %c2 = arith.constant 2 : index
    %2 = memref.load %arg1[%c2] : memref<3xf32, #tpu.memory_space<smem>>
    %c0_0 = arith.constant 0 : index
    %c0_1 = arith.constant 0 : index
    %c0_2 = arith.constant 0 : index
    %3 = vector.load %arg2[%c0_0, %c0_1, %c0_2] : memref<2x8x128xf32, #tpu.memory_space<vmem>>, vector<1x8x128xf32>
    %4 = vector.shape_cast %3 : vector<1x8x128xf32> to vector<8x128xf32>
    %c1_3 = arith.constant 1 : index
    %c0_4 = arith.constant 0 : index
    %c0_5 = arith.constant 0 : index
    %5 = vector.load %arg2[%c1_3, %c0_4, %c0_5] : memref<2x8x128xf32, #tpu.memory_space<vmem>>, vector<1x8x128xf32>
    %6 = vector.shape_cast %5 : vector<1x8x128xf32> to vector<8x128xf32>
    %7 = vector.broadcast %0 : f32 to vector<8x128xf32>
    %8 = arith.mulf %4, %7 : vector<8x128xf32>
    %9 = vector.broadcast %1 : f32 to vector<8x128xf32>
    %10 = arith.mulf %6, %9 : vector<8x128xf32>
    %11 = arith.addf %8, %10 : vector<8x128xf32>
    %12 = vector.broadcast %2 : f32 to vector<8x128xf32>
    %13 = arith.addf %11, %12 : vector<8x128xf32>
    %c0_6 = arith.constant 0 : index
    %c0_7 = arith.constant 0 : index
    %14 = vector.load %arg3[%c0_6, %c0_7] : memref<8x128xf32, #tpu.memory_space<vmem>>, vector<8x128xf32>
    tpu.vector_store %arg3[%c0_6, %c0_7], %13 {strides = array<i32>} : memref<8x128xf32, #tpu.memory_space<vmem>>, vector<8x128xf32>,
    return
  }
  func.func @transform_0(%arg0: i32) -> i32 {
    %c0_i32 = arith.constant 0 : i32
    %c0_i32_0 = arith.constant 0 : i32
    return %c0_i32 : i32
  }
  func.func @transform_1(%arg0: i32) -> (i32, i32, i32) {
    %c0_i32 = arith.constant 0 : i32
    %c0_i32_0 = arith.constant 0 : i32
    %c0_i32_1 = arith.constant 0 : i32
    return %c0_i32, %arg0, %c0_i32_0 : i32, i32, i32
  }
  func.func @transform_2(%arg0: i32) -> (i32, i32) {
    %c0_i32 = arith.constant 0 : i32
    %c0_i32_0 = arith.constant 0 : i32
    return %arg0, %c0_i32 : i32, i32
  }
}

</mosaic_0001>

<llo_original>
// kernel: tpu_custom_call.1
$region0: #{tpu_custom_call.1}
  #allocation0 [shape = 'u32[]', space=smem, size = 0x4, offset = 0x4, fixed_abs, tag = 'smem constant byte address 0x4 - core index']
  #allocation1 [shape = 'u32[144,128]{1,0:T(1,128)}', space=vmem, size = 0x12000, scoped, tag = 'internal scratch']
  %s0 = inlined_call_operand.hbm [shape: f32[3], index: 0, kind: input, shape index: {}]
  %s1 = inlined_call_operand.hbm [shape: f32[2,8,128], index: 1, kind: input, shape index: {}]
  %s2 = inlined_call_operand.hbm [shape: f32[8,128], index: 2, kind: output, shape index: {}]
  %s3 = sld [smem:[#allocation0]]
  $region26: #{tpu_custom_call.1} parent=0
    _
  %s5 = ssub.s32 1, %s3
  %s6 = scalar_select 0, %s5, %s3
  $region1: #{tpu_custom_call.1} parent=0
    #allocation2 [shape = 'u8[512]{0}', space=smem, size = 0x200, scoped, tag = 'input window, operand 0, single buffered']
    #allocation3 [shape = 's32[1]{0}', space=sflag, size = 0x4, scoped, tag = 'scoped memory for tpu_custom_call.1']
    #allocation4 [shape = 's32[1]{0}', space=sflag, size = 0x4, scoped, tag = 'scoped memory for tpu_custom_call.1']
    #allocation5 [shape = 's32[1]{0}', space=sflag, size = 0x4, scoped, tag = 'scoped memory for tpu_custom_call.1']
    #allocation6 [shape = 'u8[8192]{0}', space=vmem, size = 0x2000, scoped, tag = 'input window, operand 1, single buffered']
    #allocation7 [shape = 'u8[4096]{0}', space=vmem, size = 0x1000, scoped, tag = 'output window, operand 0, single buffered']
    %7 = vsyncpa [#allocation5], 0
    %8 = vsyncpa [#allocation3], 0
    %9 = vsyncpa [#allocation4], 0
    // Predicated region
    $region2: #{tpu_custom_call.1} parent=1 // pred_check
      _
    $region3: #{tpu_custom_call.1} parent=1 // pred_check_branch
      %11 = sbr.rel (0) target = $region5
    $region4: #{tpu_custom_call.1} parent=1 // pred_region
      %s13 = ssub.s32 16, 16
      %14 = vsyncadd [#allocation5], %s13
      %17 = dma.hbm_to_smem %s0, 16, [#allocation2], [#allocation5]
    $region5: #{tpu_custom_call.1} parent=1 // pred_fallthru
      _
    // Predicated region
    $region6: #{tpu_custom_call.1} parent=1 // pred_check
      _
    $region7: #{tpu_custom_call.1} parent=1 // pred_check_branch
      %19 = sbr.rel (0) target = $region9
    $region8: #{tpu_custom_call.1} parent=1 // pred_region
      %s21 = ssub.s32 256, 256
      %22 = vsyncadd [#allocation3], %s21
      %s23 = sshll.u32 [#allocation6], 4
      %s24 = int_to_ptr.vmem [resolvable:$true] %s23
      %29 = dma.hbm_to_vmem [thread:$0]  %s1, 256, %s24, [#allocation3], 128, 128, 8
    $region9: #{tpu_custom_call.1} parent=1 // pred_fallthru
      _
    // Predicated region
    $region10: #{tpu_custom_call.1} parent=1 // pred_check
      _
    $region11: #{tpu_custom_call.1} parent=1 // pred_check_branch
      %31 = sbr.rel (0) target = $region13
    $region12: #{tpu_custom_call.1} parent=1 // pred_region
      %32 = dma.done [#allocation5], 16
    $region13: #{tpu_custom_call.1} parent=1 // pred_fallthru
      _
    // Predicated region
    $region14: #{tpu_custom_call.1} parent=1 // pred_check
      _
    $region15: #{tpu_custom_call.1} parent=1 // pred_check_branch
      %34 = sbr.rel (0) target = $region17
    $region16: #{tpu_custom_call.1} parent=1 // pred_region
      %35 = dma.done [#allocation3], 256
    $region17: #{tpu_custom_call.1} parent=1 // pred_fallthru
      _
    %36 = sfence
    %s37 = sld [smem:[#allocation2]]
    %s38 = sld [smem:[#allocation2 + $0x1]]
    %s39 = sld [smem:[#allocation2 + $0x2]]
    %v40 = vld [vmem:[#allocation6] sm:$0xff]
    %s41 = scalar_lea.vmem [#allocation6], 8
    %v42 = vld [vmem:[%s41] sm:$0xff]
    %v43 = vstv %s37
    %v44 = vmul.f32 %v40, %v43
    %v45 = vstv %s38
    %v46 = vmul.f32 %v42, %v45
    %v47 = vadd.f32 %v44, %v46
    %v48 = vstv %s39
    %v49 = vadd.f32 %v47, %v48
    %50 = vst [vmem:[#allocation7] sm:$0xff] %v49
    // Predicated region
    $region18: #{tpu_custom_call.1} parent=1 // pred_check
      _
    $region19: #{tpu_custom_call.1} parent=1 // pred_check_branch
      %52 = sbr.rel (0) target = $region21
    $region20: #{tpu_custom_call.1} parent=1 // pred_region
      %s54 = ssub.s32 128, 128
      %55 = vsyncadd [#allocation4], %s54
      %s57 = sshll.u32 [#allocation7], 4
      %s58 = int_to_ptr.vmem [resolvable:$true] %s57
      %60 = dma.vmem_to_hbm [thread:$0]  %s58, 128, %s2, [#allocation4]
    $region21: #{tpu_custom_call.1} parent=1 // pred_fallthru
      _
    // Predicated region
    $region22: #{tpu_custom_call.1} parent=1 // pred_check
      _
    $region23: #{tpu_custom_call.1} parent=1 // pred_check_branch
      %62 = sbr.rel (0) target = $region25
    $region24: #{tpu_custom_call.1} parent=1 // pred_region
      %63 = dma.done [#allocation4], 128
    $region25: #{tpu_custom_call.1} parent=1 // pred_fallthru
      _
    %64 = vsyncpa [#allocation3], 1
    %65 = vsyncpa [#allocation4], 1
    %66 = vsyncpa [#allocation5], 1

</llo_original>
